<compile_context>
chip_gen: v6e
topology: v6e:2x2x1
jax: 0.10.0
libtpu: 0.0.40
codegen_flags: <defaults>
</compile_context>

<pallas_src>
import functools
import math

import numpy as np
import jax
import jax.numpy as jnp
from jax.experimental import pallas as pl
from jax.experimental.pallas import tpu as pltpu


# ----------------------------- Pallas kernel --------------------------------

def segnbdt_kernel(x_ref, wc_ref, b_ref, out_ref, *, num_classes, num_levels):
    """One (batch, spatial-tile) block.

    x_ref   : (Cin, T)  features for T pixels (pixels on the lane axis)
    wc_ref  : (C, Cin)  1x1-conv weight
    b_ref   : (C, 1)    conv bias
    out_ref : (C, T)    one-hot predicted class per pixel (class order)
    """
    x = x_ref[...]
    # Backbone head: 1x1 conv == per-pixel channel matmul (MXU, f32 accumulate).
    logits = jnp.dot(wc_ref[...], x, preferred_element_type=jnp.float32) + b_ref[...]

    c = num_classes
    t = logits.shape[-1]
    class_idx = jax.lax.broadcasted_iota(jnp.int32, (c, 1), 0)

    # Hard tree traversal, fully vectorized over pixels.
    # `s` is the per-pixel indicator (over classes) of the classes under the
    # pixel's *current* tree node; after num_levels rounds exactly one class
    # remains and `s` IS the required one-hot output, already in class order.
    s = jnp.ones((c, t), jnp.float32)
    for level in range(num_levels):
        seg = c >> level            # classes under each current-level node
        half = seg >> 1
        in_left = (class_idx & (seg - 1)) < half                 # (C, 1) bool
        masked = logits * s                                      # current subtree only
        left_sum = jnp.sum(jnp.where(in_left, masked, 0.0), axis=0, keepdims=True)
        right_sum = jnp.sum(jnp.where(in_left, 0.0, masked), axis=0, keepdims=True)
        # Equal-size halves: comparing sums == comparing means; tie -> left
        # child (matches torch.max tie behavior in the reference module).
        go_right = (right_sum > left_sum).astype(jnp.float32)    # (1, T)
        keep = jnp.where(in_left, 1.0 - go_right, go_right)      # (C, T)
        s = s * keep

    out_ref[...] = s.astype(out_ref.dtype)


# ------------------------------ wrapper --------------------------------------

def _pick_spatial_tile(hw, target=2048):
    """Largest 128-multiple divisor of `hw`, capped at `target`.

    Falls back to the full spatial extent (always a legal block dim) when hw is
    not a multiple of 128, so every shape is supported without tail masking.
    """
    if hw % 128 != 0:
        return hw
    best = 128
    tile = 128
    cap = min(hw, target)
    while tile <= cap:
        if hw % tile == 0:
            best = tile
        tile += 128
    return best


def segnbdt_forward(x_nchw, w_conv, b_conv, *, target_tile=2048):
    """x_nchw: (N,Cin,H,W); w_conv: (C,Cin) 1x1-conv weight; b_conv: (C,1)."""
    n, cin, h, w = x_nchw.shape
    c = w_conv.shape[0]
    depth = int(round(math.log2(c)))
    assert (1 << depth) == c, "synthetic balanced tree requires power-of-2 classes"
    hw = h * w
    tile = _pick_spatial_tile(hw, target_tile)
    assert hw % tile == 0

    x3 = x_nchw.reshape(n, cin, hw)          # free reshape, stays NCHW-ordered

    kernel = functools.partial(segnbdt_kernel, num_classes=c, num_levels=depth)
    out = pl.pallas_call(
        kernel,
        out_shape=jax.ShapeDtypeStruct((n, c, hw), jnp.float32),
        grid_spec=pltpu.PrefetchScalarGridSpec(
            num_scalar_prefetch=0,
            grid=(n, hw // tile),
            in_specs=[
                pl.BlockSpec((None, cin, tile), lambda b, i: (b, 0, i)),
                pl.BlockSpec((c, cin), lambda b, i: (0, 0)),
                pl.BlockSpec((c, 1), lambda b, i: (0, 0)),
            ],
            out_specs=pl.BlockSpec((None, c, tile), lambda b, i: (b, 0, i)),
        ),
        compiler_params=pltpu.CompilerParams(
            dimension_semantics=("parallel", "parallel"),
            # Blocks are small (<= a few hundred KiB double-buffered); keep the
            # scoped-VMEM request modest so it fits every generation (v5e
            # 16 MiB default scoped, v7x 64 MiB physical) with headroom.
            vmem_limit_bytes=32 * 1024 * 1024,
        ),
    )(x3, w_conv, b_conv)

    return out.reshape(n, c, h, w)           # free reshape back to NCHW


# ------------------------------ reference ------------------------------------

def reference_numpy(x_nchw, w_conv, b_conv, num_classes, tie_rtol=1e-5):
    """Per-pixel binary-search traversal mirroring the kernel math (f32 sums).

    Returns (preds (N,H,W) int, stable (N,H,W) bool) where `stable` marks
    pixels whose every decision had a clear margin (robust to f32 reordering).
    """
    x = np.asarray(x_nchw, dtype=np.float32)
    wc = np.asarray(w_conv, dtype=np.float32)                 # (C, Cin)
    bb = np.asarray(b_conv, dtype=np.float32).reshape(-1)     # (C,)
    n, cin, h, w = x.shape
    hw = h * w
    logits = np.einsum("ck,nkp->ncp", wc, x.reshape(n, cin, hw)) + bb[None, :, None]
    preds = np.zeros((n, hw), dtype=np.int64)
    stable = np.ones((n, hw), dtype=bool)
    for bi in range(n):
        for pi in range(hw):
            lo, hi = 0, num_classes
            while hi - lo > 1:
                mid = (lo + hi) // 2
                ls = float(logits[bi, lo:mid, pi].sum())
                rs = float(logits[bi, mid:hi, pi].sum())
                if abs(rs - ls) <= tie_rtol * max(abs(rs), abs(ls), 1.0):
                    stable[bi, pi] = False
                if rs > ls:
                    lo = mid
                else:
                    hi = mid
            preds[bi, pi] = lo
    return preds.reshape(n, h, w), stable.reshape(n, h, w)


# -------------------------------- main ----------------------------------------

if __name__ == "__main__":
    N, CIN, H, W = 2, 4, 16, 16
    NUM_CLASSES = 8

    key = jax.random.PRNGKey(0)
    kx, kw, kb = jax.random.split(key, 3)
    x = jax.random.normal(kx, (N, CIN, H, W), dtype=jnp.float32)
    # Deterministic synthetic "model": 1x1-conv segmentation head CIN -> C.
    w_conv = jax.random.normal(kw, (NUM_CLASSES, CIN), dtype=jnp.float32) * 0.5
    b_conv = jax.random.normal(kb, (NUM_CLASSES, 1), dtype=jnp.float32) * 0.1

    out = segnbdt_forward(x, w_conv, b_conv)
    out = jax.block_until_ready(out)
    out_np = np.asarray(out)

    assert out_np.shape == (N, NUM_CLASSES, H, W)
    # Output must be a valid one-hot over the class axis at every pixel.
    assert np.all((out_np == 0.0) | (out_np == 1.0))
    assert np.all(out_np.sum(axis=1) == 1.0)

    kernel_preds = out_np.argmax(axis=1)                       # (N, H, W)
    ref_preds, stable = reference_numpy(x, w_conv, b_conv, NUM_CLASSES)
    # Compare only pixels whose tree decisions have a clear margin; near-tie
    # pixels are legitimately summation-order dependent in float32.
    assert stable.mean() > 0.5
    np.testing.assert_array_equal(kernel_preds[stable], ref_preds[stable])

    print("KERNEL_OK")
</pallas_src>

<mosaic_0001>
module attributes {stable_mosaic.version = 11 : i64} {
  func.func @segnbdt_kernel(%arg0: i32, %arg1: i32, %arg2: memref<1x4x256xf32, #tpu.memory_space<vmem>>, %arg3: memref<8x4xf32, #tpu.memory_space<vmem>>, %arg4: memref<8x1xf32, #tpu.memory_space<vmem>>, %arg5: memref<1x8x256xf32, #tpu.memory_space<vmem>>) attributes {dimension_semantics = [#tpu.dimension_semantics<parallel>, #tpu.dimension_semantics<parallel>], iteration_bounds = array<i64: 2, 1>, scalar_prefetch = 0 : i64, scratch_operands = 0 : i64, tpu.core_type = #tpu.core_type<tc>, window_params = [{transform_indices = @transform_0, window_bounds = array<i64: 1, 4, 256>}, {pipeline_mode = #tpu.pipeline_mode<synchronous>, transform_indices = @transform_1, window_bounds = array<i64: 8, 4>}, {pipeline_mode = #tpu.pipeline_mode<synchronous>, transform_indices = @transform_2, window_bounds = array<i64: 8, 1>}, {transform_indices = @transform_3, window_bounds = array<i64: 1, 8, 256>}]} {
    %c0 = arith.constant 0 : index
    %c0_0 = arith.constant 0 : index
    %c0_1 = arith.constant 0 : index
    %0 = vector.load %arg2[%c0, %c0_0, %c0_1] : memref<1x4x256xf32, #tpu.memory_space<vmem>>, vector<1x4x256xf32>
    %1 = vector.shape_cast %0 : vector<1x4x256xf32> to vector<4x256xf32>
    %c0_2 = arith.constant 0 : index
    %c0_3 = arith.constant 0 : index
    %2 = vector.load %arg3[%c0_2, %c0_3] : memref<8x4xf32, #tpu.memory_space<vmem>>, vector<8x4xf32>
    %cst = arith.constant dense<0.000000e+00> : vector<8x256xf32>
    %3 = tpu.matmul %2, %1, %cst {dimension_numbers = #tpu.dot_dimension_numbers<[1], [0], [0], [1], [0, 0, 1, 1], [], []>} : vector<8x4xf32>, vector<4x256xf32>, vector<8x256xf32> -> vector<8x256xf32>
    %c0_4 = arith.constant 0 : index
    %c0_5 = arith.constant 0 : index
    %4 = vector.load %arg4[%c0_4, %c0_5] : memref<8x1xf32, #tpu.memory_space<vmem>>, vector<8x1xf32>
    %5 = vector.broadcast %4 : vector<8x1xf32> to vector<8x256xf32>
    %6 = arith.addf %3, %5 : vector<8x256xf32>
    %7 = tpu.iota {dimensions = array<i32: 0>} : vector<8x1xi32>
    %cst_6 = arith.constant 1.000000e+00 : f32
    %8 = vector.broadcast %cst_6 : f32 to vector<8x256xf32>
    %c7_i32 = arith.constant 7 : i32
    %9 = vector.broadcast %c7_i32 : i32 to vector<8x1xi32>
    %10 = arith.andi %7, %9 : vector<8x1xi32>
    %c4_i32 = arith.constant 4 : i32
    %11 = vector.broadcast %c4_i32 : i32 to vector<8x1xi32>
    %12 = arith.cmpi slt, %10, %11 : vector<8x1xi32>
    %13 = arith.mulf %6, %8 : vector<8x256xf32>
    %cst_7 = arith.constant 0.000000e+00 : f32
    %14 = vector.shape_cast %12 : vector<8x1xi1> to vector<8x1xi1>
    %15 = vector.broadcast %14 : vector<8x1xi1> to vector<8x256xi1>
    %16 = vector.broadcast %cst_7 : f32 to vector<8x256xf32>
    %17 = arith.select %15, %13, %16 : vector<8x256xi1>, vector<8x256xf32>
    %cst_8 = arith.constant dense<0.000000e+00> : vector<256xf32>
    %18 = vector.multi_reduction <add>, %17, %cst_8 [0] : vector<8x256xf32> to vector<256xf32>
    %19 = vector.shape_cast %18 : vector<256xf32> to vector<1x256xf32>
    %cst_9 = arith.constant 0.000000e+00 : f32
    %20 = vector.shape_cast %12 : vector<8x1xi1> to vector<8x1xi1>
    %21 = vector.broadcast %20 : vector<8x1xi1> to vector<8x256xi1>
    %22 = vector.broadcast %cst_9 : f32 to vector<8x256xf32>
    %23 = arith.select %21, %22, %13 : vector<8x256xi1>, vector<8x256xf32>
    %cst_10 = arith.constant dense<0.000000e+00> : vector<256xf32>
    %24 = vector.multi_reduction <add>, %23, %cst_10 [0] : vector<8x256xf32> to vector<256xf32>
    %25 = vector.shape_cast %24 : vector<256xf32> to vector<1x256xf32>
    %26 = arith.cmpf ogt, %25, %19 : vector<1x256xf32>
    %27 = arith.extui %26 : vector<1x256xi1> to vector<1x256xi32>
    %28 = arith.sitofp %27 : vector<1x256xi32> to vector<1x256xf32>
    %cst_11 = arith.constant 1.000000e+00 : f32
    %29 = vector.broadcast %cst_11 : f32 to vector<1x256xf32>
    %30 = arith.subf %29, %28 : vector<1x256xf32>
    %31 = vector.shape_cast %12 : vector<8x1xi1> to vector<8x1xi1>
    %32 = vector.broadcast %31 : vector<8x1xi1> to vector<8x256xi1>
    %33 = vector.shape_cast %30 : vector<1x256xf32> to vector<1x256xf32>
    %34 = vector.broadcast %33 : vector<1x256xf32> to vector<8x256xf32>
    %35 = vector.shape_cast %28 : vector<1x256xf32> to vector<1x256xf32>
    %36 = vector.broadcast %35 : vector<1x256xf32> to vector<8x256xf32>
    %37 = arith.select %32, %34, %36 : vector<8x256xi1>, vector<8x256xf32>
    %38 = arith.mulf %8, %37 : vector<8x256xf32>
    %c3_i32 = arith.constant 3 : i32
    %39 = vector.broadcast %c3_i32 : i32 to vector<8x1xi32>
    %40 = arith.andi %7, %39 : vector<8x1xi32>
    %c2_i32 = arith.constant 2 : i32
    %41 = vector.broadcast %c2_i32 : i32 to vector<8x1xi32>
    %42 = arith.cmpi slt, %40, %41 : vector<8x1xi32>
    %43 = arith.mulf %6, %38 : vector<8x256xf32>
    %cst_12 = arith.constant 0.000000e+00 : f32
    %44 = vector.shape_cast %42 : vector<8x1xi1> to vector<8x1xi1>
    %45 = vector.broadcast %44 : vector<8x1xi1> to vector<8x256xi1>
    %46 = vector.broadcast %cst_12 : f32 to vector<8x256xf32>
    %47 = arith.select %45, %43, %46 : vector<8x256xi1>, vector<8x256xf32>
    %cst_13 = arith.constant dense<0.000000e+00> : vector<256xf32>
    %48 = vector.multi_reduction <add>, %47, %cst_13 [0] : vector<8x256xf32> to vector<256xf32>
    %49 = vector.shape_cast %48 : vector<256xf32> to vector<1x256xf32>
    %cst_14 = arith.constant 0.000000e+00 : f32
    %50 = vector.shape_cast %42 : vector<8x1xi1> to vector<8x1xi1>
    %51 = vector.broadcast %50 : vector<8x1xi1> to vector<8x256xi1>
    %52 = vector.broadcast %cst_14 : f32 to vector<8x256xf32>
    %53 = arith.select %51, %52, %43 : vector<8x256xi1>, vector<8x256xf32>
    %cst_15 = arith.constant dense<0.000000e+00> : vector<256xf32>
    %54 = vector.multi_reduction <add>, %53, %cst_15 [0] : vector<8x256xf32> to vector<256xf32>
    %55 = vector.shape_cast %54 : vector<256xf32> to vector<1x256xf32>
    %56 = arith.cmpf ogt, %55, %49 : vector<1x256xf32>
    %57 = arith.extui %56 : vector<1x256xi1> to vector<1x256xi32>
    %58 = arith.sitofp %57 : vector<1x256xi32> to vector<1x256xf32>
    %cst_16 = arith.constant 1.000000e+00 : f32
    %59 = vector.broadcast %cst_16 : f32 to vector<1x256xf32>
    %60 = arith.subf %59, %58 : vector<1x256xf32>
    %61 = vector.shape_cast %42 : vector<8x1xi1> to vector<8x1xi1>
    %62 = vector.broadcast %61 : vector<8x1xi1> to vector<8x256xi1>
    %63 = vector.shape_cast %60 : vector<1x256xf32> to vector<1x256xf32>
    %64 = vector.broadcast %63 : vector<1x256xf32> to vector<8x256xf32>
    %65 = vector.shape_cast %58 : vector<1x256xf32> to vector<1x256xf32>
    %66 = vector.broadcast %65 : vector<1x256xf32> to vector<8x256xf32>
    %67 = arith.select %62, %64, %66 : vector<8x256xi1>, vector<8x256xf32>
    %68 = arith.mulf %38, %67 : vector<8x256xf32>
    %c1_i32 = arith.constant 1 : i32
    %69 = vector.broadcast %c1_i32 : i32 to vector<8x1xi32>
    %70 = arith.andi %7, %69 : vector<8x1xi32>
    %c1_i32_17 = arith.constant 1 : i32
    %71 = vector.broadcast %c1_i32_17 : i32 to vector<8x1xi32>
    %72 = arith.cmpi slt, %70, %71 : vector<8x1xi32>
    %73 = arith.mulf %6, %68 : vector<8x256xf32>
    %cst_18 = arith.constant 0.000000e+00 : f32
    %74 = vector.shape_cast %72 : vector<8x1xi1> to vector<8x1xi1>
    %75 = vector.broadcast %74 : vector<8x1xi1> to vector<8x256xi1>
    %76 = vector.broadcast %cst_18 : f32 to vector<8x256xf32>
    %77 = arith.select %75, %73, %76 : vector<8x256xi1>, vector<8x256xf32>
    %cst_19 = arith.constant dense<0.000000e+00> : vector<256xf32>
    %78 = vector.multi_reduction <add>, %77, %cst_19 [0] : vector<8x256xf32> to vector<256xf32>
    %79 = vector.shape_cast %78 : vector<256xf32> to vector<1x256xf32>
    %cst_20 = arith.constant 0.000000e+00 : f32
    %80 = vector.shape_cast %72 : vector<8x1xi1> to vector<8x1xi1>
    %81 = vector.broadcast %80 : vector<8x1xi1> to vector<8x256xi1>
    %82 = vector.broadcast %cst_20 : f32 to vector<8x256xf32>
    %83 = arith.select %81, %82, %73 : vector<8x256xi1>, vector<8x256xf32>
    %cst_21 = arith.constant dense<0.000000e+00> : vector<256xf32>
    %84 = vector.multi_reduction <add>, %83, %cst_21 [0] : vector<8x256xf32> to vector<256xf32>
    %85 = vector.shape_cast %84 : vector<256xf32> to vector<1x256xf32>
    %86 = arith.cmpf ogt, %85, %79 : vector<1x256xf32>
    %87 = arith.extui %86 : vector<1x256xi1> to vector<1x256xi32>
    %88 = arith.sitofp %87 : vector<1x256xi32> to vector<1x256xf32>
    %cst_22 = arith.constant 1.000000e+00 : f32
    %89 = vector.broadcast %cst_22 : f32 to vector<1x256xf32>
    %90 = arith.subf %89, %88 : vector<1x256xf32>
    %91 = vector.shape_cast %72 : vector<8x1xi1> to vector<8x1xi1>
    %92 = vector.broadcast %91 : vector<8x1xi1> to vector<8x256xi1>
    %93 = vector.shape_cast %90 : vector<1x256xf32> to vector<1x256xf32>
    %94 = vector.broadcast %93 : vector<1x256xf32> to vector<8x256xf32>
    %95 = vector.shape_cast %88 : vector<1x256xf32> to vector<1x256xf32>
    %96 = vector.broadcast %95 : vector<1x256xf32> to vector<8x256xf32>
    %97 = arith.select %92, %94, %96 : vector<8x256xi1>, vector<8x256xf32>
    %98 = arith.mulf %68, %97 : vector<8x256xf32>
    %c0_23 = arith.constant 0 : index
    %c0_24 = arith.constant 0 : index
    %c0_25 = arith.constant 0 : index
    %99 = vector.load %arg5[%c0_23, %c0_24, %c0_25] : memref<1x8x256xf32, #tpu.memory_space<vmem>>, vector<1x8x256xf32>
    %100 = vector.shape_cast %99 : vector<1x8x256xf32> to vector<8x256xf32>
    %101 = vector.shape_cast %98 : vector<8x256xf32> to vector<1x8x256xf32>
    tpu.vector_store %arg5[%c0_23, %c0_24, %c0_25], %101 {strides = array<i32>} : memref<1x8x256xf32, #tpu.memory_space<vmem>>, vector<1x8x256xf32>,
    return
  }
  func.func @transform_0(%arg0: i32, %arg1: i32) -> (i32, i32, i32) {
    %c0_i32 = arith.constant 0 : i32
    %c0_i32_0 = arith.constant 0 : i32
    return %arg0, %c0_i32, %arg1 : i32, i32, i32
  }
  func.func @transform_1(%arg0: i32, %arg1: i32) -> (i32, i32) {
    %c0_i32 = arith.constant 0 : i32
    %c0_i32_0 = arith.constant 0 : i32
    %c0_i32_1 = arith.constant 0 : i32
    return %c0_i32, %c0_i32_0 : i32, i32
  }
  func.func @transform_2(%arg0: i32, %arg1: i32) -> (i32, i32) {
    %c0_i32 = arith.constant 0 : i32
    %c0_i32_0 = arith.constant 0 : i32
    %c0_i32_1 = arith.constant 0 : i32
    return %c0_i32, %c0_i32_0 : i32, i32
  }
  func.func @transform_3(%arg0: i32, %arg1: i32) -> (i32, i32, i32) {
    %c0_i32 = arith.constant 0 : i32
    %c0_i32_0 = arith.constant 0 : i32
    return %arg0, %c0_i32, %arg1 : i32, i32, i32
  }
}

</mosaic_0001>

<llo_original>
// kernel: tpu_custom_call.1
$region0: #{tpu_custom_call.1}
  #allocation0 [shape = 'u32[]', space=smem, size = 0x4, offset = 0x4, fixed_abs, tag = 'smem constant byte address 0x4 - core index']
  #allocation1 [shape = 'u32[144,128]{1,0:T(1,128)}', space=vmem, size = 0x12000, scoped, tag = 'internal scratch']
  %s0 = inlined_call_operand.vmem [shape: f32[2,4,256], index: 0, kind: input, shape index: {}]
  %s1 = inlined_call_operand.vmem [shape: f32[8,4], index: 1, kind: input, shape index: {}]
  %s2 = inlined_call_operand.vmem [shape: f32[8,1], index: 2, kind: input, shape index: {}]
  %s3 = inlined_call_operand.hbm [shape: f32[2,8,256], index: 3, kind: output, shape index: {}]
  %s4 = sld [smem:[#allocation0]]
  $region45: #{tpu_custom_call.1} parent=0
    _
  %s6 = ssub.s32 1, %s4
  %s7 = scalar_select 0, %s6, %s4
  $region1: #{tpu_custom_call.1} parent=0
    #allocation2 [shape = 'u8[16384]{0}', space=vmem, size = 0x4000, scoped, tag = 'output window, operand 0']
    #allocation3 [shape = 's32[2]{0}', space=sflag, size = 0x8, scoped, tag = 'scoped memory for tpu_custom_call.1']
    %8 = vsyncpa [#allocation3], 0
    %s9 = scalar_lea.sflag [#allocation3], 1
    %10 = vsyncpa %s9, 0
    loop: start=0, step=1, limit=4
    $region2: #{tpu_custom_call.1} parent=1 // loop_pre_header
      _
    $region3: #{tpu_custom_call.1} parent=1 // loop_header
      %s12 = sphi 0, %s16
      %p13 = scmp.ge.s32.totalorder %s12, 4
      %s19 = sphi 0, %s31
      %s20 = sphi 0, %s27
      %s21 = sphi 0, %s19
      %s22 = sphi 0, %s20
      %s23 = sphi 0, %s21
      %s24 = sphi 0, %s22
      %s36 = sphi 0, %s38
      %s39 = sphi 0, %s36
      %s40 = sphi 0, %s39
      %s56 = sphi 0, %s40
      %s60 = sphi 0, %s60
      %s62 = sphi 0, %s60
      %s63 = sphi 0, %s62
      %s77 = sphi 0, %s63
      %s81 = sphi 0, %s81
      %s83 = sphi 0, %s81
      %s84 = sphi 0, %s83
      %s98 = sphi 0, %s84
      %s106 = sphi 0, %s108
      %s109 = sphi 0, %s106
      %s110 = sphi 0, %s109
      %s126 = sphi 0, %s110
    $region4: #{tpu_custom_call.1} parent=1 // loop_header_branch
      %15 = sbr.rel (%p13) target = $region8
    $region5: #{tpu_custom_call.1} parent=1 // loop_body
      %s17 = ssub.s32 %s12, 1
      %s18 = ssub.s32 %s12, 2
      %s25 = sadd.s32 1, %s20
      %p26 = scmp.ge.s32.totalorder %s25, 1
      %s27 = scalar_select %p26, 0, %s25
      %s28 = sadd.s32 1, %s19
      %s29 = scalar_select %p26, %s28, %s19
      %p30 = scmp.ge.s32.totalorder %s29, 2
      %s31 = scalar_select %p30, 0, %s29
      %s32 = ssub.s32 %s19, %s31
      %s33 = ssub.s32 %s20, %s27
      %s34 = sor.u32 %s32, %s33
      %p35 = scmp.eq.s32.totalorder %s34, 0
      %s37 = sadd.s32 %s36, 1
      %s38 = scalar_select %p35, %s36, %s37
      %p41 = pneg %p35
      %p42 = scmp.eq.s32.totalorder %s12, 1
      %p43 = por %p41, %p42
      %p44 = scmp.ne.s32.totalorder %s36, %s39
      %p45 = scmp.eq.s32.totalorder %s12, 0
      %p46 = por %p44, %p45
      %p47 = scmp.ne.s32.totalorder %s36, %s39
      %p48 = scmp.eq.s32.totalorder %s17, 1
      %p49 = por %p47, %p48
      %p50 = scmp.ne.s32.totalorder %s39, %s40
      %p51 = scmp.eq.s32.totalorder %s17, 0
      %p52 = por %p50, %p51
      %p53 = scmp.ne.s32.totalorder %s39, %s40
      %p54 = scmp.eq.s32.totalorder %s18, 1
      %p55 = por %p53, %p54
      %p57 = scmp.ne.s32.totalorder %s40, %s56
      %p58 = scmp.eq.s32.totalorder %s18, 0
      %p59 = por %p57, %p58
      %s61 = sadd.s32 %s60, 1
      %p64 = scmp.eq.s32.totalorder %s12, 1
      %p65 = scmp.ne.s32.totalorder %s60, %s62
      %p66 = scmp.eq.s32.totalorder %s12, 0
      %p67 = por %p65, %p66
      %p68 = scmp.ne.s32.totalorder %s60, %s62
      %p69 = scmp.eq.s32.totalorder %s17, 1
      %p70 = por %p68, %p69
      %p71 = scmp.ne.s32.totalorder %s62, %s63
      %p72 = scmp.eq.s32.totalorder %s17, 0
      %p73 = por %p71, %p72
      %p74 = scmp.ne.s32.totalorder %s62, %s63
      %p75 = scmp.eq.s32.totalorder %s18, 1
      %p76 = por %p74, %p75
      %p78 = scmp.ne.s32.totalorder %s63, %s77
      %p79 = scmp.eq.s32.totalorder %s18, 0
      %p80 = por %p78, %p79
      %s82 = sadd.s32 %s81, 1
      %p85 = scmp.eq.s32.totalorder %s12, 1
      %p86 = scmp.ne.s32.totalorder %s81, %s83
      %p87 = scmp.eq.s32.totalorder %s12, 0
      %p88 = por %p86, %p87
      %p89 = scmp.ne.s32.totalorder %s81, %s83
      %p90 = scmp.eq.s32.totalorder %s17, 1
      %p91 = por %p89, %p90
      %p92 = scmp.ne.s32.totalorder %s83, %s84
      %p93 = scmp.eq.s32.totalorder %s17, 0
      %p94 = por %p92, %p93
      %p95 = scmp.ne.s32.totalorder %s83, %s84
      %p96 = scmp.eq.s32.totalorder %s18, 1
      %p97 = por %p95, %p96
      %p99 = scmp.ne.s32.totalorder %s84, %s98
      %p100 = scmp.eq.s32.totalorder %s18, 0
      %p101 = por %p99, %p100
      %s102 = ssub.s32 %s19, %s31
      %s103 = ssub.s32 %s20, %s27
      %s104 = sor.u32 %s102, %s103
      %p105 = scmp.eq.s32.totalorder %s104, 0
      %s107 = sadd.s32 %s106, 1
      %s108 = scalar_select %p105, %s106, %s107
      %p111 = pneg %p105
      %p112 = scmp.eq.s32.totalorder %s12, 1
      %p113 = por %p111, %p112
      %p114 = scmp.ne.s32.totalorder %s106, %s109
      %p115 = scmp.eq.s32.totalorder %s12, 0
      %p116 = por %p114, %p115
      %p117 = scmp.ne.s32.totalorder %s106, %s109
      %p118 = scmp.eq.s32.totalorder %s17, 1
      %p119 = por %p117, %p118
      %p120 = scmp.ne.s32.totalorder %s109, %s110
      %p121 = scmp.eq.s32.totalorder %s17, 0
      %p122 = por %p120, %p121
      %p123 = scmp.ne.s32.totalorder %s109, %s110
      %p124 = scmp.eq.s32.totalorder %s18, 1
      %p125 = por %p123, %p124
      %p127 = scmp.ne.s32.totalorder %s110, %s126
      %p128 = scmp.eq.s32.totalorder %s18, 0
      %p129 = por %p127, %p128
      %p130 = scmp.le.s32.totalorder 1, %s12
      %p131 = scmp.lt.s32.totalorder %s12, 3
      %p132 = pnand %p130, %p131
      %p133 = pneg %p132
      // Predicated region
      $region9: #{tpu_custom_call.1} parent=5 // pred_check
        _
      $region10: #{tpu_custom_call.1} parent=5 // pred_check_branch
        %135 = sbr.rel (%p132) target = $region12
      $region11: #{tpu_custom_call.1} parent=5 // pred_region
        %s136 = ssub.s32 %s12, 1
        // Predicated region
        $region13: #{tpu_custom_call.1} parent=11 // pred_check
          %p137 = pneg %p73
        $region14: #{tpu_custom_call.1} parent=11 // pred_check_branch
          %139 = sbr.rel (%p137) target = $region16
        $region15: #{tpu_custom_call.1} parent=11 // pred_region
          _
        $region16: #{tpu_custom_call.1} parent=11 // pred_fallthru
          _
        // Predicated region
        $region17: #{tpu_custom_call.1} parent=11 // pred_check
          %p140 = pneg %p94
        $region18: #{tpu_custom_call.1} parent=11 // pred_check_branch
          %142 = sbr.rel (%p140) target = $region20
        $region19: #{tpu_custom_call.1} parent=11 // pred_region
          _
        $region20: #{tpu_custom_call.1} parent=11 // pred_fallthru
          _
      $region12: #{tpu_custom_call.1} parent=5 // pred_fallthru
        _
      %p143 = scmp.lt.s32.totalorder %s12, 2
      // Predicated region
      $region21: #{tpu_custom_call.1} parent=5 // pred_check
        %p144 = pneg %p143
      $region22: #{tpu_custom_call.1} parent=5 // pred_check_branch
        %146 = sbr.rel (%p144) target = $region24
      $region23: #{tpu_custom_call.1} parent=5 // pred_region
        // Predicated region
        $region25: #{tpu_custom_call.1} parent=23 // pred_check
          %p147 = pneg %p46
        $region26: #{tpu_custom_call.1} parent=23 // pred_check_branch
          %149 = sbr.rel (%p147) target = $region28
        $region27: #{tpu_custom_call.1} parent=23 // pred_region
          %s150 = smul.u32 2, %s20
          %p151 = scmp.lt.s32.totalorder %s19, 1
          %s152 = scalar_select %p151, %s19, 1
          %p153 = scmp.lt.s32.totalorder %s150, 1
          %s154 = scalar_select %p153, %s150, 1
          %s155 = smul.addr %s152, 2
          %s156 = sadd.s32 %s154, %s155
          %s157 = smul.addr %s156, 4
          %s158 = scalar_lea.vmem %s0, %s157
          %s159 = smul.u32 2, %s20
        $region28: #{tpu_custom_call.1} parent=23 // pred_fallthru
          _
      $region24: #{tpu_custom_call.1} parent=5 // pred_fallthru
        _
      %p160 = scmp.le.s32.totalorder 1, %s12
      %p161 = scmp.lt.s32.totalorder %s12, 3
      %p162 = pnand %p160, %p161
      %p163 = pneg %p162
      // Predicated region
      $region29: #{tpu_custom_call.1} parent=5 // pred_check
        _
      $region30: #{tpu_custom_call.1} parent=5 // pred_check_branch
        %165 = sbr.rel (%p162) target = $region32
      $region31: #{tpu_custom_call.1} parent=5 // pred_region
        %s166 = ssub.s32 %s12, 1
        %s167 = smul.u32 2, %s22
        %p168 = scmp.lt.s32.totalorder %s21, 1
        %s169 = scalar_select %p168, %s21, 1
        %p170 = scmp.lt.s32.totalorder %s167, 1
        %s171 = scalar_select %p170, %s167, 1
        %s172 = smul.addr %s169, 2
        %s173 = sadd.s32 %s171, %s172
        %s174 = smul.addr %s173, 4
        %s175 = scalar_lea.vmem %s0, %s174
        %p176 = pneg %p52
        %p177 = pneg %p49
        %p178 = pneg %p73
        %p179 = pneg %p70
        %p180 = pneg %p94
        %p181 = pneg %p91
        %p182 = pneg %p122
        %p183 = pneg %p119
        %s184 = sand.u32 %s109, 1
        %s185 = scalar_lea.sflag [#allocation3], %s184
        %s186 = sand.u32 %s109, 1
        %s187 = smul.addr %s186, 16
        %s188 = scalar_lea.vmem [#allocation2], %s187
        %s189 = smul.u32 2, %s22
        %p190 = scmp.lt.s32.totalorder %s21, 1
        %s191 = scalar_select %p190, %s21, 1
        %p192 = scmp.lt.s32.totalorder %s189, 1
        %s193 = scalar_select %p192, %s189, 1
        %s194 = smul.addr %s191, 2
        %s195 = sadd.s32 %s193, %s194
        %s196 = smul.addr %s195, 4
        %s197 = scalar_lea.vmem %s0, %s196
        %s198 = smul.u32 2, %s22
        %s199 = smul.u32 2, %s22
        %v200 = vld [vmem:[%s197] sm:$0xff]
        %v201 = vld [vmem:[%s1] sm:$0xff]
        %v202 = vld [vmem:[%s2] sm:$0xff]
        %204 = vset.pattern.permute.xlu0 0
        %205 = vperm.xlu0 %204, %v202
        %v206 = vpop.permute.xlu0 %205
        %v209 = vcombine.high %v200, %v200
        %vm210 = vcmask 31744
        %v212 = vsel %vm210, %v201, 0
        %vm214 = vcmask 1043456
        %v215 = vsel %vm214, %v200, 0
        %v217 = vsel %vm214, %v209, 0
        %219 = vmatprep.subr.mxu0 0.0
        %220 = vmatpush1.msra.mxu0 0.0
        %221 = vmatprep.subr.mxu0 0.0
        %222 = vmatpush1.msra.mxu0 0.0
        %223 = vmatprep.subr.mxu0 0.0
        %224 = vmatpush1.msra.mxu0 0.0
        %225 = vmatprep.subr.mxu0 0.0
        %226 = vmatpush1.msra.mxu0 0.0
        %227 = vmatprep.subr.mxu0 0.0
        %228 = vmatpush1.msra.mxu0 0.0
        %229 = vmatprep.subr.mxu0 0.0
        %230 = vmatpush1.msra.mxu0 0.0
        %231 = vmatprep.subr.mxu0 0.0
        %232 = vmatpush1.msra.mxu0 0.0
        %233 = vmatprep.subr.mxu0 0.0
        %234 = vmatpush1.msra.mxu0 0.0
        %235 = vmatprep.subr.mxu0 0.0
        %236 = vmatpush1.msra.mxu0 0.0
        %237 = vmatprep.subr.mxu0 0.0
        %238 = vmatpush1.msra.mxu0 0.0
        %239 = vmatprep.subr.mxu0 0.0
        %240 = vmatpush1.msra.mxu0 0.0
        %241 = vmatprep.subr.mxu0 0.0
        %242 = vmatpush1.msra.mxu0 0.0
        %243 = vmatprep.subr.mxu0 0.0
        %244 = vmatpush1.msra.mxu0 0.0
        %245 = vmatprep.subr.mxu0 0.0
        %246 = vmatpush1.msra.mxu0 0.0
        %247 = vmatprep.subr.mxu0 0.0
        %248 = vmatpush1.msra.mxu0 0.0
        %249 = vmatprep.subr.mxu0 %v217
        %250 = vmatpush1.msra.mxu0 %v215
        %251 = vmatprep.subr.mxu0 0.0
        %252 = vmatpush2.msra.mxu0 0.0
        %253 = vmatprep.subr.mxu0 0.0
        %254 = vmatpush2.msra.mxu0 0.0
        %255 = vmatprep.subr.mxu0 0.0
        %256 = vmatpush2.msra.mxu0 0.0
        %257 = vmatprep.subr.mxu0 0.0
        %258 = vmatpush2.msra.mxu0 0.0
        %259 = vmatprep.subr.mxu0 0.0
        %260 = vmatpush2.msra.mxu0 0.0
        %261 = vmatprep.subr.mxu0 0.0
        %262 = vmatpush2.msra.mxu0 0.0
        %263 = vmatprep.subr.mxu0 0.0
        %264 = vmatpush2.msra.mxu0 0.0
        %265 = vmatprep.subr.mxu0 0.0
        %266 = vmatpush2.msra.mxu0 0.0
        %267 = vmatprep.subr.mxu0 0.0
        %268 = vmatpush2.msra.mxu0 0.0
        %269 = vmatprep.subr.mxu0 0.0
        %270 = vmatpush2.msra.mxu0 0.0
        %271 = vmatprep.subr.mxu0 0.0
        %272 = vmatpush2.msra.mxu0 0.0
        %273 = vmatprep.subr.mxu0 0.0
        %274 = vmatpush2.msra.mxu0 0.0
        %275 = vmatprep.subr.mxu0 0.0
        %276 = vmatpush2.msra.mxu0 0.0
        %277 = vmatprep.subr.mxu0 0.0
        %278 = vmatpush2.msra.mxu0 0.0
        %279 = vmatprep.subr.mxu0 0.0
        %280 = vmatpush2.msra.mxu0 0.0
        %281 = vmatprep.subr.mxu0 0.0
        %282 = vmatpush2.msra.mxu0 0.0
        %283 = vmatprep.mubr.f32.mxu0 0.0
        %284 = vmatmul.mubr.f32.gmra.mxu0 %v212
        %v285 = vpop.f32.mrf.mxu0
        %v286 = vadd.f32 %v206, %v285
        %v287 = vpop.f32.mrf.mxu0
        %v288 = vadd.f32 %v206, %v287
        %289 = vdwg.mxu0
        %v290 = vlaneseq
        %v291 = vshrl.u32 %v290, 7
        %v292 = vand.u32 %v291, 7
        %vm293 = vcmp.lt.s32.totalorder %v292, 4
        %v294 = vsel %vm293, 1, 0
        %vm295 = vcmp.eq.s32.totalorder %v294, 1
        %v296 = vsel %vm295, %v286, 0.0
        %v297 = vsel %vm295, %v288, 0.0
        %v298 = vrot.slane %v296, 4
        %v299 = vadd.f32 %v296, %v298
        %v300 = vrot.slane %v299, 2
        %v301 = vadd.f32 %v299, %v300
        %v302 = vrot.slane %v301, 1
        %v303 = vadd.f32 %v301, %v302
        %v304 = vrot.slane %v297, 4
        %v305 = vadd.f32 %v297, %v304
        %v306 = vrot.slane %v305, 2
        %v307 = vadd.f32 %v305, %v306
        %v308 = vrot.slane %v307, 1
        %v309 = vadd.f32 %v307, %v308
        %v310 = vsel %vm295, 0.0, %v286
        %v311 = vsel %vm295, 0.0, %v288
        %v312 = vrot.slane %v310, 4
        %v313 = vadd.f32 %v310, %v312
        %v314 = vrot.slane %v313, 2
        %v315 = vadd.f32 %v313, %v314
        %v316 = vrot.slane %v315, 1
        %v317 = vadd.f32 %v315, %v316
        %v318 = vrot.slane %v311, 4
        %v319 = vadd.f32 %v311, %v318
        %v320 = vrot.slane %v319, 2
        %v321 = vadd.f32 %v319, %v320
        %v322 = vrot.slane %v321, 1
        %v323 = vadd.f32 %v321, %v322
        %vm324 = vcmp.gt.f32.partialorder %v317, %v303
        %vm325 = vcmp.gt.f32.partialorder %v323, %v309
        %v326 = vsel %vm324, 1, 0
        %v327 = vsel %vm325, 1, 0
        %v328 = vcvt.s32.f32 %v326
        %v329 = vcvt.s32.f32 %v327
        %v330 = vsub.f32 1.0, %v328
        %v331 = vsub.f32 1.0, %v329
        %v332 = vsel %vm295, %v330, %v328
        %v333 = vsel %vm295, %v331, %v329
        %v334 = vand.u32 %v291, 3
        %vm335 = vcmp.lt.s32.totalorder %v334, 2
        %v336 = vmul.f32 %v286, %v332
        %v337 = vmul.f32 %v288, %v333
        %v338 = vsel %vm335, 1, 0
        %vm339 = vcmp.eq.s32.totalorder %v338, 1
        %v340 = vsel %vm339, %v336, 0.0
        %v341 = vsel %vm339, %v337, 0.0
        %v342 = vrot.slane %v340, 4
        %v343 = vadd.f32 %v340, %v342
        %v344 = vrot.slane %v343, 2
        %v345 = vadd.f32 %v343, %v344
        %v346 = vrot.slane %v345, 1
        %v347 = vadd.f32 %v345, %v346
        %v348 = vrot.slane %v341, 4
        %v349 = vadd.f32 %v341, %v348
        %v350 = vrot.slane %v349, 2
        %v351 = vadd.f32 %v349, %v350
        %v352 = vrot.slane %v351, 1
        %v353 = vadd.f32 %v351, %v352
        %v354 = vsel %vm339, 0.0, %v336
        %v355 = vsel %vm339, 0.0, %v337
        %v356 = vrot.slane %v354, 4
        %v357 = vadd.f32 %v354, %v356
        %v358 = vrot.slane %v357, 2
        %v359 = vadd.f32 %v357, %v358
        %v360 = vrot.slane %v359, 1
        %v361 = vadd.f32 %v359, %v360
        %v362 = vrot.slane %v355, 4
        %v363 = vadd.f32 %v355, %v362
        %v364 = vrot.slane %v363, 2
        %v365 = vadd.f32 %v363, %v364
        %v366 = vrot.slane %v365, 1
        %v367 = vadd.f32 %v365, %v366
        %vm368 = vcmp.gt.f32.partialorder %v361, %v347
        %vm369 = vcmp.gt.f32.partialorder %v367, %v353
        %v370 = vsel %vm368, 1, 0
        %v371 = vsel %vm369, 1, 0
        %v372 = vcvt.s32.f32 %v370
        %v373 = vcvt.s32.f32 %v371
        %v374 = vsub.f32 1.0, %v372
        %v375 = vsub.f32 1.0, %v373
        %v376 = vsel %vm339, %v374, %v372
        %v377 = vsel %vm339, %v375, %v373
        %v378 = vmul.f32 %v332, %v376
        %v379 = vmul.f32 %v333, %v377
        %v380 = vand.u32 %v291, 1
        %vm381 = vcmp.lt.s32.totalorder %v380, 1
        %v382 = vmul.f32 %v286, %v378
        %v383 = vmul.f32 %v288, %v379
        %v384 = vsel %vm381, 1, 0
        %vm385 = vcmp.eq.s32.totalorder %v384, 1
        %v386 = vsel %vm385, %v382, 0.0
        %v387 = vsel %vm385, %v383, 0.0
        %v388 = vrot.slane %v386, 4
        %v389 = vadd.f32 %v386, %v388
        %v390 = vrot.slane %v389, 2
        %v391 = vadd.f32 %v389, %v390
        %v392 = vrot.slane %v391, 1
        %v393 = vadd.f32 %v391, %v392
        %v394 = vrot.slane %v387, 4
        %v395 = vadd.f32 %v387, %v394
        %v396 = vrot.slane %v395, 2
        %v397 = vadd.f32 %v395, %v396
        %v398 = vrot.slane %v397, 1
        %v399 = vadd.f32 %v397, %v398
        %v400 = vsel %vm385, 0.0, %v382
        %v401 = vsel %vm385, 0.0, %v383
        %v402 = vrot.slane %v400, 4
        %v403 = vadd.f32 %v400, %v402
        %v404 = vrot.slane %v403, 2
        %v405 = vadd.f32 %v403, %v404
        %v406 = vrot.slane %v405, 1
        %v407 = vadd.f32 %v405, %v406
        %v408 = vrot.slane %v401, 4
        %v409 = vadd.f32 %v401, %v408
        %v410 = vrot.slane %v409, 2
        %v411 = vadd.f32 %v409, %v410
        %v412 = vrot.slane %v411, 1
        %v413 = vadd.f32 %v411, %v412
        %vm414 = vcmp.gt.f32.partialorder %v407, %v393
        %vm415 = vcmp.gt.f32.partialorder %v413, %v399
        %v416 = vsel %vm414, 1, 0
        %v417 = vsel %vm415, 1, 0
        %v418 = vcvt.s32.f32 %v416
        %v419 = vcvt.s32.f32 %v417
        %v420 = vsub.f32 1.0, %v418
        %v421 = vsub.f32 1.0, %v419
        %v422 = vsel %vm385, %v420, %v418
        %v423 = vsel %vm385, %v421, %v419
        %v424 = vmul.f32 %v378, %v422
        %v425 = vmul.f32 %v379, %v423
        %426 = vst [vmem:[%s188] sm:$0xff] %v424
        %427 = vst [vmem:[%s188 + $0x8] sm:$0xff] %v425
        %s428 = sand.u32 %s109, 1
        %s429 = scalar_lea.sflag [#allocation3], %s428
        %s430 = sand.u32 %s109, 1
        %s431 = smul.addr %s430, 16
        %s432 = scalar_lea.vmem [#allocation2], %s431
        // Predicated region
        $region33: #{tpu_custom_call.1} parent=31 // pred_check
          %p433 = pneg %p119
        $region34: #{tpu_custom_call.1} parent=31 // pred_check_branch
          %435 = sbr.rel (%p433) target = $region36
        $region35: #{tpu_custom_call.1} parent=31 // pred_region
          %s436 = smul.u32 2, %s22
          %s438 = ssub.s32 256, 256
          %439 = vsyncadd %s429, %s438
          %s440 = smul.addr %s21, 2
          %s441 = sadd.s32 %s436, %s440
          %s442 = smul.addr %s441, 128
          %s443 = scalar_lea.hbm %s3, %s442
          %s445 = sshll.u32 %s432, 4
          %s446 = int_to_ptr.vmem [resolvable:$true] %s445
          %448 = dma.vmem_to_hbm [thread:$0]  %s446, 256, %s443, %s429
        $region36: #{tpu_custom_call.1} parent=31 // pred_fallthru
          _
      $region32: #{tpu_custom_call.1} parent=5 // pred_fallthru
        _
      %p449 = scmp.le.s32.totalorder 2, %s12
      // Predicated region
      $region37: #{tpu_custom_call.1} parent=5 // pred_check
        %p450 = pneg %p449
      $region38: #{tpu_custom_call.1} parent=5 // pred_check_branch
        %452 = sbr.rel (%p450) target = $region40
      $region39: #{tpu_custom_call.1} parent=5 // pred_region
        %s453 = ssub.s32 %s12, 2
        // Predicated region
        $region41: #{tpu_custom_call.1} parent=39 // pred_check
          %p454 = pneg %p125
        $region42: #{tpu_custom_call.1} parent=39 // pred_check_branch
          %456 = sbr.rel (%p454) target = $region44
        $region43: #{tpu_custom_call.1} parent=39 // pred_region
          %s457 = sand.u32 %s110, 1
          %s458 = scalar_lea.sflag [#allocation3], %s457
          %s459 = sand.u32 %s110, 1
          %s460 = smul.addr %s459, 16
          %s461 = scalar_lea.vmem [#allocation2], %s460
          %462 = dma.done %s458, 256
        $region44: #{tpu_custom_call.1} parent=39 // pred_fallthru
          _
      $region40: #{tpu_custom_call.1} parent=5 // pred_fallthru
        _
    $region6: #{tpu_custom_call.1} parent=1 // loop_footer
      %s16 = sadd.s32 1, %s12
    $region7: #{tpu_custom_call.1} parent=1 // loop_footer_branch
      %11 = sbr.rel target = $region3
    $region8: #{tpu_custom_call.1} parent=1 // loop_exit
      _
    %463 = vsyncpa [#allocation3], 1
    %s464 = scalar_lea.sflag [#allocation3], 1
    %465 = vsyncpa %s464, 1

</llo_original>
